<compile_context>
chip_gen: v7x
topology: tpu7x:2x2x1
jax: 0.10.0
libtpu: 0.0.40
codegen_flags: <defaults>
</compile_context>

<pallas_src>
import jax
import jax.numpy as jnp
from jax.experimental import pallas as pl
from jax.experimental.pallas import tpu as pltpu


def _round_up(a, b):
    return ((a + b - 1) // b) * b


def _pad_cast(a, shape, dtype):
    """Cast and zero-pad `a` up to `shape` (no-op copy avoided when already matching)."""
    a = a.astype(dtype)
    if a.shape == tuple(shape):
        return a
    out = jnp.zeros(shape, dtype)
    return out.at[tuple(slice(0, s) for s in a.shape)].set(a)


def _sgconv_kernel_fused(a_ref, xw_ref, norm_ref, bc_ref, wl_ref, bl_ref,
                         o_ref, acc_ref):
    # Project-first path (Dout_p <= Din_p): features already carry (norm_s * X) @ Wc^T.
    # a_ref:    (tile_n, tile_k)   bf16 adjacency tile (dst rows x src cols)
    # xw_ref:   (tile_k, Dout_p)   bf16 pre-projected, pre-scaled features
    # norm_ref: (tile_n, 1)        f32 destination-side D^{-1/2}
    # bc_ref:   (1, Dout_p)        f32 SGConv bias
    # wl_ref:   (Dout_p, Dout_p)   f32 Linear weight (transposed, zero-padded)
    # bl_ref:   (1, Dout_p)        f32 Linear bias
    # o_ref:    (tile_n, Dout_p)   output tile
    # acc_ref:  (tile_n, Dout_p)   f32 aggregation accumulator (VMEM scratch)
    k = pl.program_id(1)

    @pl.when(k == 0)
    def _():
        acc_ref[...] = jnp.zeros_like(acc_ref)

    acc_ref[...] += jnp.dot(a_ref[...], xw_ref[...],
                            preferred_element_type=jnp.float32)

    @pl.when(k == pl.num_programs(1) - 1)
    def _():
        h = acc_ref[...] * norm_ref[...] + bc_ref[...]        # dst-side D^{-1/2}, bias
        h = jnp.maximum(h, 0.0)                               # relu
        h = jnp.dot(h, wl_ref[...],
                    preferred_element_type=jnp.float32) + bl_ref[...]
        h = jnp.maximum(h, 0.0)                               # relu
        o_ref[...] = h.astype(o_ref.dtype)


def _sgconv_kernel_unfused(a_ref, xn_ref, norm_ref, wc_ref, bc_ref, wl_ref, bl_ref,
                           o_ref, acc_ref):
    # Aggregate-first path (Din_p < Dout_p): aggregate raw (norm_s * X), project in finalize.
    k = pl.program_id(1)

    @pl.when(k == 0)
    def _():
        acc_ref[...] = jnp.zeros_like(acc_ref)

    acc_ref[...] += jnp.dot(a_ref[...], xn_ref[...],
                            preferred_element_type=jnp.float32)

    @pl.when(k == pl.num_programs(1) - 1)
    def _():
        h = acc_ref[...] * norm_ref[...]
        h = jnp.dot(h, wc_ref[...],
                    preferred_element_type=jnp.float32) + bc_ref[...]
        h = jnp.maximum(h, 0.0)
        h = jnp.dot(h, wl_ref[...],
                    preferred_element_type=jnp.float32) + bl_ref[...]
        h = jnp.maximum(h, 0.0)
        o_ref[...] = h.astype(o_ref.dtype)


def my_sgconv_forward(adj, x, wc, bc, wl, bl, *, tile_n=512, tile_k=512):
    """adj: (N, N) dense adjacency (row i = incoming edges of node i), x: (N, Din).
    wc: (Dout, Din), bc: (Dout,) -- SGConv fc params (PyTorch layout).
    wl: (Dout, Dhid), bl: (Dout,) -- Linear params (Dhid == Dout).
    tile_n / tile_k should be powers of two (tile_n >= 8, tile_k >= 128)."""
    N, din = x.shape
    dout = wc.shape[0]
    assert wl.shape[1] == dout, "module requires hidden_size == output_size"

    f32 = jnp.float32

    # ---- padded problem sizes: lane-dense features, tileable node dims ----
    din_p = _round_up(din, 128)
    dout_p = _round_up(dout, 128)
    n_pad = _round_up(N, 128)
    tile_n = min(tile_n, n_pad)
    tile_k = min(tile_k, n_pad)
    n_pad = _round_up(_round_up(n_pad, tile_n), tile_k)

    # adjacency: one cast+pad pass to bf16 (0/1 is exact); degrees come from the bf16 copy
    adj_p = _pad_cast(adj, (n_pad, n_pad), jnp.bfloat16)
    deg = jnp.maximum(jnp.sum(adj_p[:N], axis=1, dtype=f32, keepdims=True), 1.0)
    norm = deg ** -0.5                                         # (N, 1) symmetric norm

    norm_p = jnp.ones((n_pad, 1), f32).at[:N, :].set(norm)
    bc_p = jnp.zeros((1, dout_p), f32).at[:, :dout].set(bc.reshape(1, -1).astype(f32))
    wl_p = jnp.zeros((dout_p, dout_p), f32).at[:dout, :dout].set(wl.T.astype(f32))
    bl_p = jnp.zeros((1, dout_p), f32).at[:, :dout].set(bl.reshape(1, -1).astype(f32))

    grid = (n_pad // tile_n, n_pad // tile_k)  # (dst tiles "parallel", src reduction "arbitrary")
    project_first = dout_p <= din_p            # aggregate over the narrower feature width

    if project_first:
        # (norm_s * X) @ Wc^T once in XLA -> aggregation runs over Dout features
        xw = ((x.astype(f32) * norm) @ wc.T.astype(f32))       # (N, Dout), f32
        feat_p = _pad_cast(xw, (n_pad, dout_p), jnp.bfloat16)
        feat_w = dout_p
        kernel = _sgconv_kernel_fused
        in_specs = [
            pl.BlockSpec((tile_n, tile_k), lambda i, k: (i, k)),   # adjacency tile
            pl.BlockSpec((tile_k, feat_w), lambda i, k: (k, 0)),   # projected features slab
            pl.BlockSpec((tile_n, 1), lambda i, k: (i, 0)),        # destination-side norm
            pl.BlockSpec((1, dout_p), lambda i, k: (0, 0)),        # bc
            pl.BlockSpec((dout_p, dout_p), lambda i, k: (0, 0)),   # Wl^T
            pl.BlockSpec((1, dout_p), lambda i, k: (0, 0)),        # bl
        ]
        operands = (adj_p, feat_p, norm_p, bc_p, wl_p, bl_p)
    else:
        xn = (x.astype(f32) * norm)                             # (N, Din), f32
        feat_p = _pad_cast(xn, (n_pad, din_p), jnp.bfloat16)
        feat_w = din_p
        wc_p = jnp.zeros((din_p, dout_p), f32).at[:din, :dout].set(wc.T.astype(f32))
        kernel = _sgconv_kernel_unfused
        in_specs = [
            pl.BlockSpec((tile_n, tile_k), lambda i, k: (i, k)),   # adjacency tile
            pl.BlockSpec((tile_k, feat_w), lambda i, k: (k, 0)),   # pre-scaled features slab
            pl.BlockSpec((tile_n, 1), lambda i, k: (i, 0)),        # destination-side norm
            pl.BlockSpec((din_p, dout_p), lambda i, k: (0, 0)),    # Wc^T
            pl.BlockSpec((1, dout_p), lambda i, k: (0, 0)),        # bc
            pl.BlockSpec((dout_p, dout_p), lambda i, k: (0, 0)),   # Wl^T
            pl.BlockSpec((1, dout_p), lambda i, k: (0, 0)),        # bl
        ]
        operands = (adj_p, feat_p, norm_p, wc_p, bc_p, wl_p, bl_p)

    out_p = pl.pallas_call(
        kernel,
        out_shape=jax.ShapeDtypeStruct((n_pad, dout_p), x.dtype),
        grid_spec=pltpu.PrefetchScalarGridSpec(
            num_scalar_prefetch=0,
            grid=grid,
            in_specs=in_specs,
            out_specs=pl.BlockSpec((tile_n, dout_p), lambda i, k: (i, 0)),
            scratch_shapes=[pltpu.VMEM((tile_n, feat_w), jnp.float32)],
        ),
        compiler_params=pltpu.CompilerParams(
            dimension_semantics=("parallel", "arbitrary"),
            vmem_limit_bytes=48 * 1024 * 1024,
        ),
    )(*operands)

    return out_p[:N, :dout]


def _reference(adj, x, wc, bc, wl, bl):
    deg = jnp.clip(jnp.sum(adj, axis=1, keepdims=True), 1.0, None)
    norm = deg ** -0.5
    h = norm * (adj @ (norm * x))
    h = jnp.maximum(h @ wc.T + bc, 0.0)
    h = jnp.maximum(h @ wl.T + bl, 0.0)
    return h


if __name__ == "__main__":
    # Small deterministic problem: 16 nodes, input_size=8, hidden_size=output_size=4.
    N = 16
    input_size = 8
    hidden_size = 4
    output_size = 4   # must equal hidden_size for the PyTorch module to be well-typed

    key = jax.random.PRNGKey(0)
    k_adj, k_x, k_wc, k_bc, k_wl, k_bl = jax.random.split(key, 6)

    # random undirected graph with self-loops (no zero in-degree)
    rand = jax.random.uniform(k_adj, (N, N))
    adj = (rand < 0.25).astype(jnp.float32)
    adj = jnp.maximum(adj, adj.T)                              # symmetrize
    adj = jnp.maximum(adj, jnp.eye(N, dtype=jnp.float32))      # self-loops

    x = jax.random.normal(k_x, (N, input_size), dtype=jnp.float32)

    # deterministic parameter init (shapes follow torch Linear: [out, in] + [out])
    wc = 0.1 * jax.random.normal(k_wc, (output_size, input_size), dtype=jnp.float32)
    bc = 0.1 * jax.random.normal(k_bc, (output_size,), dtype=jnp.float32)
    wl = 0.1 * jax.random.normal(k_wl, (output_size, hidden_size), dtype=jnp.float32)
    bl = 0.1 * jax.random.normal(k_bl, (output_size,), dtype=jnp.float32)

    fwd = jax.jit(my_sgconv_forward)
    out = fwd(adj, x, wc, bc, wl, bl)
    out = jax.block_until_ready(out)

    ref = _reference(adj, x, wc, bc, wl, bl)
    assert out.shape == (N, output_size)
    # bf16 aggregation (f32 accumulation) -> relaxed tolerance vs the f32 reference
    assert jnp.allclose(out, ref, atol=3e-2, rtol=3e-2), "mismatch vs reference"

    print("KERNEL_OK")
</pallas_src>

<mosaic_0001>
module attributes {stable_mosaic.version = 11 : i64} {
  func.func @_sgconv_kernel_fused(%arg0: i32, %arg1: i32, %arg2: memref<128x128xbf16, #tpu.memory_space<vmem>>, %arg3: memref<128x128xbf16, #tpu.memory_space<vmem>>, %arg4: memref<128x1xf32, #tpu.memory_space<vmem>>, %arg5: memref<1x128xf32, #tpu.memory_space<vmem>>, %arg6: memref<128x128xf32, #tpu.memory_space<vmem>>, %arg7: memref<1x128xf32, #tpu.memory_space<vmem>>, %arg8: memref<128x128xf32, #tpu.memory_space<vmem>>, %arg9: memref<128x128xf32, #tpu.memory_space<vmem>>) attributes {dimension_semantics = [#tpu.dimension_semantics<parallel>, #tpu.dimension_semantics<arbitrary>], iteration_bounds = array<i64: 1, 1>, scalar_prefetch = 0 : i64, scratch_operands = 1 : i64, tpu.core_type = #tpu.core_type<tc>, window_params = [{transform_indices = @transform_0, window_bounds = array<i64: 128, 128>}, {transform_indices = @transform_1, window_bounds = array<i64: 128, 128>}, {transform_indices = @transform_2, window_bounds = array<i64: 128, 1>}, {pipeline_mode = #tpu.pipeline_mode<synchronous>, transform_indices = @transform_3, window_bounds = array<i64: 1, 128>}, {pipeline_mode = #tpu.pipeline_mode<synchronous>, transform_indices = @transform_4, window_bounds = array<i64: 128, 128>}, {pipeline_mode = #tpu.pipeline_mode<synchronous>, transform_indices = @transform_5, window_bounds = array<i64: 1, 128>}, {transform_indices = @transform_6, window_bounds = array<i64: 128, 128>}]} {
    %c0_i32 = arith.constant 0 : i32
    %0 = arith.cmpi eq, %arg1, %c0_i32 : i32
    %1 = arith.extui %0 : i1 to i32
    %c0_i32_0 = arith.constant 0 : i32
    %2 = arith.cmpi ne, %1, %c0_i32_0 : i32
    scf.if %2 {
      %cst_10 = arith.constant 0.000000e+00 : f32
      %12 = vector.broadcast %cst_10 : f32 to vector<128x128xf32>
      %c0_11 = arith.constant 0 : index
      %c0_12 = arith.constant 0 : index
      %13 = vector.load %arg9[%c0_11, %c0_12] : memref<128x128xf32, #tpu.memory_space<vmem>>, vector<128x128xf32>
      tpu.vector_store %arg9[%c0_11, %c0_12], %12 {strides = array<i32>} : memref<128x128xf32, #tpu.memory_space<vmem>>, vector<128x128xf32>,
    } else {
    }
    %c0 = arith.constant 0 : index
    %c0_1 = arith.constant 0 : index
    %3 = vector.load %arg9[%c0, %c0_1] : memref<128x128xf32, #tpu.memory_space<vmem>>, vector<128x128xf32>
    %c0_2 = arith.constant 0 : index
    %c0_3 = arith.constant 0 : index
    %4 = vector.load %arg2[%c0_2, %c0_3] : memref<128x128xbf16, #tpu.memory_space<vmem>>, vector<128x128xbf16>
    %c0_4 = arith.constant 0 : index
    %c0_5 = arith.constant 0 : index
    %5 = vector.load %arg3[%c0_4, %c0_5] : memref<128x128xbf16, #tpu.memory_space<vmem>>, vector<128x128xbf16>
    %cst = arith.constant dense<0.000000e+00> : vector<128x128xf32>
    %6 = tpu.matmul %4, %5, %cst {dimension_numbers = #tpu.dot_dimension_numbers<[1], [0], [0], [1], [0, 0, 1, 1], [], []>} : vector<128x128xbf16>, vector<128x128xbf16>, vector<128x128xf32> -> vector<128x128xf32>
    %7 = arith.addf %3, %6 : vector<128x128xf32>
    %c0_6 = arith.constant 0 : index
    %c0_7 = arith.constant 0 : index
    %8 = vector.load %arg9[%c0_6, %c0_7] : memref<128x128xf32, #tpu.memory_space<vmem>>, vector<128x128xf32>
    tpu.vector_store %arg9[%c0_6, %c0_7], %7 {strides = array<i32>} : memref<128x128xf32, #tpu.memory_space<vmem>>, vector<128x128xf32>,
    %c0_i32_8 = arith.constant 0 : i32
    %9 = arith.cmpi eq, %arg1, %c0_i32_8 : i32
    %10 = arith.extui %9 : i1 to i32
    %c0_i32_9 = arith.constant 0 : i32
    %11 = arith.cmpi ne, %10, %c0_i32_9 : i32
    scf.if %11 {
      %c0_10 = arith.constant 0 : index
      %c0_11 = arith.constant 0 : index
      %12 = vector.load %arg9[%c0_10, %c0_11] : memref<128x128xf32, #tpu.memory_space<vmem>>, vector<128x128xf32>
      %c0_12 = arith.constant 0 : index
      %c0_13 = arith.constant 0 : index
      %13 = vector.load %arg4[%c0_12, %c0_13] : memref<128x1xf32, #tpu.memory_space<vmem>>, vector<128x1xf32>
      %14 = vector.broadcast %13 : vector<128x1xf32> to vector<128x128xf32>
      %15 = arith.mulf %12, %14 : vector<128x128xf32>
      %c0_14 = arith.constant 0 : index
      %c0_15 = arith.constant 0 : index
      %16 = vector.load %arg5[%c0_14, %c0_15] : memref<1x128xf32, #tpu.memory_space<vmem>>, vector<1x128xf32>
      %17 = vector.broadcast %16 : vector<1x128xf32> to vector<128x128xf32>
      %18 = arith.addf %15, %17 : vector<128x128xf32>
      %cst_16 = arith.constant 0.000000e+00 : f32
      %19 = vector.broadcast %cst_16 : f32 to vector<128x128xf32>
      %20 = arith.maximumf %18, %19 : vector<128x128xf32>
      %c0_17 = arith.constant 0 : index
      %c0_18 = arith.constant 0 : index
      %21 = vector.load %arg6[%c0_17, %c0_18] : memref<128x128xf32, #tpu.memory_space<vmem>>, vector<128x128xf32>
      %cst_19 = arith.constant dense<0.000000e+00> : vector<128x128xf32>
      %22 = tpu.matmul %20, %21, %cst_19 {dimension_numbers = #tpu.dot_dimension_numbers<[1], [0], [0], [1], [0, 0, 1, 1], [], []>} : vector<128x128xf32>, vector<128x128xf32>, vector<128x128xf32> -> vector<128x128xf32>
      %c0_20 = arith.constant 0 : index
      %c0_21 = arith.constant 0 : index
      %23 = vector.load %arg7[%c0_20, %c0_21] : memref<1x128xf32, #tpu.memory_space<vmem>>, vector<1x128xf32>
      %24 = vector.broadcast %23 : vector<1x128xf32> to vector<128x128xf32>
      %25 = arith.addf %22, %24 : vector<128x128xf32>
      %cst_22 = arith.constant 0.000000e+00 : f32
      %26 = vector.broadcast %cst_22 : f32 to vector<128x128xf32>
      %27 = arith.maximumf %25, %26 : vector<128x128xf32>
      %c0_23 = arith.constant 0 : index
      %c0_24 = arith.constant 0 : index
      %28 = vector.load %arg8[%c0_23, %c0_24] : memref<128x128xf32, #tpu.memory_space<vmem>>, vector<128x128xf32>
      tpu.vector_store %arg8[%c0_23, %c0_24], %27 {strides = array<i32>} : memref<128x128xf32, #tpu.memory_space<vmem>>, vector<128x128xf32>,
    } else {
    }
    return
  }
  func.func @transform_0(%arg0: i32, %arg1: i32) -> (i32, i32) {
    %c0_i32 = arith.constant 0 : i32
    return %arg0, %arg1 : i32, i32
  }
  func.func @transform_1(%arg0: i32, %arg1: i32) -> (i32, i32) {
    %c0_i32 = arith.constant 0 : i32
    %c0_i32_0 = arith.constant 0 : i32
    return %arg1, %c0_i32 : i32, i32
  }
  func.func @transform_2(%arg0: i32, %arg1: i32) -> (i32, i32) {
    %c0_i32 = arith.constant 0 : i32
    %c0_i32_0 = arith.constant 0 : i32
    return %arg0, %c0_i32 : i32, i32
  }
  func.func @transform_3(%arg0: i32, %arg1: i32) -> (i32, i32) {
    %c0_i32 = arith.constant 0 : i32
    %c0_i32_0 = arith.constant 0 : i32
    %c0_i32_1 = arith.constant 0 : i32
    return %c0_i32, %c0_i32_0 : i32, i32
  }
  func.func @transform_4(%arg0: i32, %arg1: i32) -> (i32, i32) {
    %c0_i32 = arith.constant 0 : i32
    %c0_i32_0 = arith.constant 0 : i32
    %c0_i32_1 = arith.constant 0 : i32
    return %c0_i32, %c0_i32_0 : i32, i32
  }
  func.func @transform_5(%arg0: i32, %arg1: i32) -> (i32, i32) {
    %c0_i32 = arith.constant 0 : i32
    %c0_i32_0 = arith.constant 0 : i32
    %c0_i32_1 = arith.constant 0 : i32
    return %c0_i32, %c0_i32_0 : i32, i32
  }
  func.func @transform_6(%arg0: i32, %arg1: i32) -> (i32, i32) {
    %c0_i32 = arith.constant 0 : i32
    %c0_i32_0 = arith.constant 0 : i32
    return %arg0, %c0_i32 : i32, i32
  }
}

</mosaic_0001>

<llo_original>
// kernel: my_sgconv_forward.1
$region0: #{my_sgconv_forward.1}
  #allocation0 [shape = 'u32[]', space=smem, size = 0x4, offset = 0x4, fixed_abs, tag = 'smem constant byte address 0x4 - core index']
  #allocation1 [shape = 'u32[144,128]{1,0:T(1,128)}', space=vmem, size = 0x12000, scoped, tag = 'internal scratch']
  #allocation2 [shape = 'f32[128,128]{1,0:T(8,128)}', space=vmem, size = 0x10000, scoped, tag = 'scratch operand']
  %s0 = inlined_call_operand.vmem [shape: bf16[128,128], index: 0, kind: input, shape index: {}]
  %s1 = inlined_call_operand.vmem [shape: bf16[128,128], index: 1, kind: input, shape index: {}]
  %s2 = inlined_call_operand.vmem [shape: f32[128,1], index: 2, kind: input, shape index: {}]
  %s3 = inlined_call_operand.vmem [shape: f32[1,128], index: 3, kind: input, shape index: {}]
  %s4 = inlined_call_operand.vmem [shape: f32[128,128], index: 4, kind: input, shape index: {}]
  %s5 = inlined_call_operand.vmem [shape: f32[1,128], index: 5, kind: input, shape index: {}]
  %s6 = inlined_call_operand.vmem [shape: f32[128,128], index: 6, kind: output, shape index: {}]
  %s7 = sld [smem:[#allocation0]]
  $region42: #{my_sgconv_forward.1} parent=0
    _
  %s9 = ssub.s32 1, %s7
  %s10 = scalar_select 0, %s9, %s7
  // Predicated region
  $region2: #{my_sgconv_forward.1} parent=0 // pred_check
    _
  $region3: #{my_sgconv_forward.1} parent=0 // pred_check_branch
    %12 = sbr.rel (0) target = $region5
  $region4: #{my_sgconv_forward.1} parent=0 // pred_region
    _
  $region5: #{my_sgconv_forward.1} parent=0 // pred_fallthru
    _
  // Predicated region
  $region6: #{my_sgconv_forward.1} parent=0 // pred_check
    _
  $region7: #{my_sgconv_forward.1} parent=0 // pred_check_branch
    %14 = sbr.rel (0) target = $region9
  $region8: #{my_sgconv_forward.1} parent=0 // pred_region
    _
  $region9: #{my_sgconv_forward.1} parent=0 // pred_fallthru
    _
  // Predicated region
  $region10: #{my_sgconv_forward.1} parent=0 // pred_check
    _
  $region11: #{my_sgconv_forward.1} parent=0 // pred_check_branch
    %16 = sbr.rel (0) target = $region13
  $region12: #{my_sgconv_forward.1} parent=0 // pred_region
    _
  $region13: #{my_sgconv_forward.1} parent=0 // pred_fallthru
    _
  // Predicated region
  $region14: #{my_sgconv_forward.1} parent=0 // pred_check
    _
  $region15: #{my_sgconv_forward.1} parent=0 // pred_check_branch
    %18 = sbr.rel (0) target = $region17
  $region16: #{my_sgconv_forward.1} parent=0 // pred_region
    _
  $region17: #{my_sgconv_forward.1} parent=0 // pred_fallthru
    _
  // Predicated region
  $region18: #{my_sgconv_forward.1} parent=0 // pred_check
    _
  $region19: #{my_sgconv_forward.1} parent=0 // pred_check_branch
    %20 = sbr.rel (0) target = $region21
  $region20: #{my_sgconv_forward.1} parent=0 // pred_region
    _
  $region21: #{my_sgconv_forward.1} parent=0 // pred_fallthru
    _
  // Predicated region
  $region22: #{my_sgconv_forward.1} parent=0 // pred_check
    _
  $region23: #{my_sgconv_forward.1} parent=0 // pred_check_branch
    %22 = sbr.rel (0) target = $region25
  $region24: #{my_sgconv_forward.1} parent=0 // pred_region
    _
  $region25: #{my_sgconv_forward.1} parent=0 // pred_fallthru
    _
  %p24 = scmp.eq.s32.totalorder 0, 0
  // Predicated region
  $region26: #{my_sgconv_forward.1} parent=0 // pred_check
    %p25 = pneg %p24
  $region27: #{my_sgconv_forward.1} parent=0 // pred_check_branch
    %27 = sbr.rel (%p25) target = $region29
  $region28: #{my_sgconv_forward.1} parent=0 // pred_region
    %28 = vst [vmem:[#allocation2] sm:$0xff] 0.0
    %29 = vst [vmem:[#allocation2 + $0x8] sm:$0xff] 0.0
    %30 = vst [vmem:[#allocation2 + $0x10] sm:$0xff] 0.0
    %31 = vst [vmem:[#allocation2 + $0x18] sm:$0xff] 0.0
    %32 = vst [vmem:[#allocation2 + $0x20] sm:$0xff] 0.0
    %33 = vst [vmem:[#allocation2 + $0x28] sm:$0xff] 0.0
    %34 = vst [vmem:[#allocation2 + $0x30] sm:$0xff] 0.0
    %35 = vst [vmem:[#allocation2 + $0x38] sm:$0xff] 0.0
    %36 = vst [vmem:[#allocation2 + $0x40] sm:$0xff] 0.0
    %37 = vst [vmem:[#allocation2 + $0x48] sm:$0xff] 0.0
    %38 = vst [vmem:[#allocation2 + $0x50] sm:$0xff] 0.0
    %39 = vst [vmem:[#allocation2 + $0x58] sm:$0xff] 0.0
    %40 = vst [vmem:[#allocation2 + $0x60] sm:$0xff] 0.0
    %41 = vst [vmem:[#allocation2 + $0x68] sm:$0xff] 0.0
    %42 = vst [vmem:[#allocation2 + $0x70] sm:$0xff] 0.0
    %43 = vst [vmem:[#allocation2 + $0x78] sm:$0xff] 0.0
  $region29: #{my_sgconv_forward.1} parent=0 // pred_fallthru
    _
  %v44 = vld [vmem:[#allocation2] sm:$0xff]
  %v45 = vld [vmem:[#allocation2 + $0x8] sm:$0xff]
  %v46 = vld [vmem:[#allocation2 + $0x10] sm:$0xff]
  %v47 = vld [vmem:[#allocation2 + $0x18] sm:$0xff]
  %v48 = vld [vmem:[#allocation2 + $0x20] sm:$0xff]
  %v49 = vld [vmem:[#allocation2 + $0x28] sm:$0xff]
  %v50 = vld [vmem:[#allocation2 + $0x30] sm:$0xff]
  %v51 = vld [vmem:[#allocation2 + $0x38] sm:$0xff]
  %v52 = vld [vmem:[#allocation2 + $0x40] sm:$0xff]
  %v53 = vld [vmem:[#allocation2 + $0x48] sm:$0xff]
  %v54 = vld [vmem:[#allocation2 + $0x50] sm:$0xff]
  %v55 = vld [vmem:[#allocation2 + $0x58] sm:$0xff]
  %v56 = vld [vmem:[#allocation2 + $0x60] sm:$0xff]
  %v57 = vld [vmem:[#allocation2 + $0x68] sm:$0xff]
  %v58 = vld [vmem:[#allocation2 + $0x70] sm:$0xff]
  %v59 = vld [vmem:[#allocation2 + $0x78] sm:$0xff]
  %v60 = vld [vmem:[%s0] sm:$0xf]
  %v61 = vld [vmem:[%s0 + $0x4] sm:$0xf]
  %v62 = vld [vmem:[%s0 + $0x8] sm:$0xf]
  %v63 = vld [vmem:[%s0 + $0xc] sm:$0xf]
  %v64 = vld [vmem:[%s0 + $0x10] sm:$0xf]
  %v65 = vld [vmem:[%s0 + $0x14] sm:$0xf]
  %v66 = vld [vmem:[%s0 + $0x18] sm:$0xf]
  %v67 = vld [vmem:[%s0 + $0x1c] sm:$0xf]
  %v68 = vld [vmem:[%s0 + $0x20] sm:$0xf]
  %v69 = vld [vmem:[%s0 + $0x24] sm:$0xf]
  %v70 = vld [vmem:[%s0 + $0x28] sm:$0xf]
  %v71 = vld [vmem:[%s0 + $0x2c] sm:$0xf]
  %v72 = vld [vmem:[%s0 + $0x30] sm:$0xf]
  %v73 = vld [vmem:[%s0 + $0x34] sm:$0xf]
  %v74 = vld [vmem:[%s0 + $0x38] sm:$0xf]
  %v75 = vld [vmem:[%s0 + $0x3c] sm:$0xf]
  %v76 = vld [vmem:[%s1] sm:$0xf]
  %v77 = vld [vmem:[%s1 + $0x4] sm:$0xf]
  %v78 = vld [vmem:[%s1 + $0x8] sm:$0xf]
  %v79 = vld [vmem:[%s1 + $0xc] sm:$0xf]
  %v80 = vld [vmem:[%s1 + $0x10] sm:$0xf]
  %v81 = vld [vmem:[%s1 + $0x14] sm:$0xf]
  %v82 = vld [vmem:[%s1 + $0x18] sm:$0xf]
  %v83 = vld [vmem:[%s1 + $0x1c] sm:$0xf]
  %v84 = vld [vmem:[%s1 + $0x20] sm:$0xf]
  %v85 = vld [vmem:[%s1 + $0x24] sm:$0xf]
  %v86 = vld [vmem:[%s1 + $0x28] sm:$0xf]
  %v87 = vld [vmem:[%s1 + $0x2c] sm:$0xf]
  %v88 = vld [vmem:[%s1 + $0x30] sm:$0xf]
  %v89 = vld [vmem:[%s1 + $0x34] sm:$0xf]
  %v90 = vld [vmem:[%s1 + $0x38] sm:$0xf]
  %v91 = vld [vmem:[%s1 + $0x3c] sm:$0xf]
  %v108 = vunpack.c.l.b16 %v60
  %v109 = vunpack.c.l.b16 %v61
  %v110 = vunpack.c.l.b16 %v62
  %v111 = vunpack.c.l.b16 %v63
  %v112 = vunpack.c.l.b16 %v64
  %v113 = vunpack.c.l.b16 %v65
  %v114 = vunpack.c.l.b16 %v66
  %v115 = vunpack.c.l.b16 %v67
  %v116 = vunpack.c.l.b16 %v68
  %v117 = vunpack.c.l.b16 %v69
  %v118 = vunpack.c.l.b16 %v70
  %v119 = vunpack.c.l.b16 %v71
  %v120 = vunpack.c.l.b16 %v72
  %v121 = vunpack.c.l.b16 %v73
  %v122 = vunpack.c.l.b16 %v74
  %v123 = vunpack.c.l.b16 %v75
  %v124 = vpack.c.b16 %v109, %v108
  %v125 = vpack.c.b16 %v111, %v110
  %v126 = vpack.c.b16 %v113, %v112
  %v127 = vpack.c.b16 %v115, %v114
  %v128 = vpack.c.b16 %v117, %v116
  %v129 = vpack.c.b16 %v119, %v118
  %v130 = vpack.c.b16 %v121, %v120
  %v131 = vpack.c.b16 %v123, %v122
  %v156 = vunpack.c.l.b16 %v76
  %v157 = vunpack.c.l.b16 %v77
  %v158 = vunpack.c.l.b16 %v78
  %v159 = vunpack.c.l.b16 %v79
  %v160 = vunpack.c.l.b16 %v80
  %v161 = vunpack.c.l.b16 %v81
  %v162 = vunpack.c.l.b16 %v82
  %v163 = vunpack.c.l.b16 %v83
  %v164 = vunpack.c.l.b16 %v84
  %v165 = vunpack.c.l.b16 %v85
  %v166 = vunpack.c.l.b16 %v86
  %v167 = vunpack.c.l.b16 %v87
  %v168 = vunpack.c.l.b16 %v88
  %v169 = vunpack.c.l.b16 %v89
  %v170 = vunpack.c.l.b16 %v90
  %v171 = vunpack.c.l.b16 %v91
  %v172 = vpack.c.b16 %v157, %v156
  %v173 = vpack.c.b16 %v159, %v158
  %v174 = vpack.c.b16 %v161, %v160
  %v175 = vpack.c.b16 %v163, %v162
  %v176 = vpack.c.b16 %v165, %v164
  %v177 = vpack.c.b16 %v167, %v166
  %v178 = vpack.c.b16 %v169, %v168
  %v179 = vpack.c.b16 %v171, %v170
  %188 = vmatprep.subr.bf16.mxu0 0
  %189 = vmatpush1.bf16.msra.mxu0 %v172
  %190 = vmatprep.subr.bf16.mxu0 0
  %191 = vmatpush1.bf16.msra.mxu0 %v173
  %192 = vmatprep.subr.bf16.mxu0 0
  %193 = vmatpush1.bf16.msra.mxu0 %v174
  %194 = vmatprep.subr.bf16.mxu0 0
  %195 = vmatpush1.bf16.msra.mxu0 %v175
  %196 = vmatprep.subr.bf16.mxu0 0
  %197 = vmatpush1.bf16.msra.mxu0 %v176
  %198 = vmatprep.subr.bf16.mxu0 0
  %199 = vmatpush1.bf16.msra.mxu0 %v177
  %200 = vmatprep.subr.bf16.mxu0 0
  %201 = vmatpush1.bf16.msra.mxu0 %v178
  %202 = vmatprep.subr.bf16.mxu0 0
  %203 = vmatpush1.bf16.msra.mxu0 %v179
  %204 = vmatprep.subr.bf16.mxu0 0
  %205 = vmatpush1.bf16.msra.mxu0 0
  %206 = vmatprep.subr.bf16.mxu0 0
  %207 = vmatpush1.bf16.msra.mxu0 0
  %208 = vmatprep.subr.bf16.mxu0 0
  %209 = vmatpush1.bf16.msra.mxu0 0
  %210 = vmatprep.subr.bf16.mxu0 0
  %211 = vmatpush1.bf16.msra.mxu0 0
  %212 = vmatprep.subr.bf16.mxu0 0
  %213 = vmatpush1.bf16.msra.mxu0 0
  %214 = vmatprep.subr.bf16.mxu0 0
  %215 = vmatpush1.bf16.msra.mxu0 0
  %216 = vmatprep.subr.bf16.mxu0 0
  %217 = vmatpush1.bf16.msra.mxu0 0
  %218 = vmatprep.subr.bf16.mxu0 0
  %219 = vmatpush1.bf16.msra.mxu0 0
  %220 = vmatprep.mubr.bf16.mxu0 0
  %221 = vmatmul.mubr.bf16.gmra.mrb[0].mxu0 %v124
  %v222 = vpop.f32.mrb[0].mxu0
  %v223 = vadd.f32 0.0, %v222
  %v224 = vpop.f32.mrb[0].mxu0
  %v225 = vpop.f32.mrb[0].mxu0
  %v226 = vadd.f32 0.0, %v225
  %v227 = vpop.f32.mrb[0].mxu0
  %228 = vmatprep.mubr.bf16.mxu0 0
  %229 = vmatmul.mubr.bf16.gmra.mrb[0].mxu0 %v125
  %v230 = vpop.f32.mrb[0].mxu0
  %v231 = vadd.f32 0.0, %v230
  %v232 = vpop.f32.mrb[0].mxu0
  %v233 = vpop.f32.mrb[0].mxu0
  %v234 = vadd.f32 0.0, %v233
  %v235 = vpop.f32.mrb[0].mxu0
  %236 = vmatprep.mubr.bf16.mxu0 0
  %237 = vmatmul.mubr.bf16.gmra.mrb[0].mxu0 %v126
  %v238 = vpop.f32.mrb[0].mxu0
  %v239 = vadd.f32 0.0, %v238
  %v240 = vpop.f32.mrb[0].mxu0
  %v241 = vpop.f32.mrb[0].mxu0
  %v242 = vadd.f32 0.0, %v241
  %v243 = vpop.f32.mrb[0].mxu0
  %244 = vmatprep.mubr.bf16.mxu0 0
  %245 = vmatmul.mubr.bf16.gmra.mrb[0].mxu0 %v127
  %v246 = vpop.f32.mrb[0].mxu0
  %v247 = vadd.f32 0.0, %v246
  %v248 = vpop.f32.mrb[0].mxu0
  %v249 = vpop.f32.mrb[0].mxu0
  %v250 = vadd.f32 0.0, %v249
  %v251 = vpop.f32.mrb[0].mxu0
  %252 = vmatprep.mubr.bf16.mxu0 0
  %253 = vmatmul.mubr.bf16.gmra.mrb[0].mxu0 %v128
  %v254 = vpop.f32.mrb[0].mxu0
  %v255 = vadd.f32 0.0, %v254
  %v256 = vpop.f32.mrb[0].mxu0
  %v257 = vpop.f32.mrb[0].mxu0
  %v258 = vadd.f32 0.0, %v257
  %v259 = vpop.f32.mrb[0].mxu0
  %260 = vmatprep.mubr.bf16.mxu0 0
  %261 = vmatmul.mubr.bf16.gmra.mrb[0].mxu0 %v129
  %v262 = vpop.f32.mrb[0].mxu0
  %v263 = vadd.f32 0.0, %v262
  %v264 = vpop.f32.mrb[0].mxu0
  %v265 = vpop.f32.mrb[0].mxu0
  %v266 = vadd.f32 0.0, %v265
  %v267 = vpop.f32.mrb[0].mxu0
  %268 = vmatprep.mubr.bf16.mxu0 0
  %269 = vmatmul.mubr.bf16.gmra.mrb[0].mxu0 %v130
  %v270 = vpop.f32.mrb[0].mxu0
  %v271 = vadd.f32 0.0, %v270
  %v272 = vpop.f32.mrb[0].mxu0
  %v273 = vpop.f32.mrb[0].mxu0
  %v274 = vadd.f32 0.0, %v273
  %v275 = vpop.f32.mrb[0].mxu0
  %276 = vmatprep.mubr.bf16.mxu0 0
  %277 = vmatmul.mubr.bf16.gmra.mrb[0].mxu0 %v131
  %v278 = vpop.f32.mrb[0].mxu0
  %v279 = vadd.f32 0.0, %v278
  %v280 = vpop.f32.mrb[0].mxu0
  %v281 = vpop.f32.mrb[0].mxu0
  %v282 = vadd.f32 0.0, %v281
  %v283 = vpop.f32.mrb[0].mxu0
  %284 = vdwg.mxu0
  %v285 = vadd.f32 %v44, %v223
  %v286 = vadd.f32 %v45, %v226
  %v287 = vadd.f32 %v46, %v231
  %v288 = vadd.f32 %v47, %v234
  %v289 = vadd.f32 %v48, %v239
  %v290 = vadd.f32 %v49, %v242
  %v291 = vadd.f32 %v50, %v247
  %v292 = vadd.f32 %v51, %v250
  %v293 = vadd.f32 %v52, %v255
  %v294 = vadd.f32 %v53, %v258
  %v295 = vadd.f32 %v54, %v263
  %v296 = vadd.f32 %v55, %v266
  %v297 = vadd.f32 %v56, %v271
  %v298 = vadd.f32 %v57, %v274
  %v299 = vadd.f32 %v58, %v279
  %v300 = vadd.f32 %v59, %v282
  %301 = vst [vmem:[#allocation2] sm:$0xff] %v285
  %302 = vst [vmem:[#allocation2 + $0x8] sm:$0xff] %v286
  %303 = vst [vmem:[#allocation2 + $0x10] sm:$0xff] %v287
  %304 = vst [vmem:[#allocation2 + $0x18] sm:$0xff] %v288
  %305 = vst [vmem:[#allocation2 + $0x20] sm:$0xff] %v289
  %306 = vst [vmem:[#allocation2 + $0x28] sm:$0xff] %v290
  %307 = vst [vmem:[#allocation2 + $0x30] sm:$0xff] %v291
  %308 = vst [vmem:[#allocation2 + $0x38] sm:$0xff] %v292
  %309 = vst [vmem:[#allocation2 + $0x40] sm:$0xff] %v293
  %310 = vst [vmem:[#allocation2 + $0x48] sm:$0xff] %v294
  %311 = vst [vmem:[#allocation2 + $0x50] sm:$0xff] %v295
  %312 = vst [vmem:[#allocation2 + $0x58] sm:$0xff] %v296
  %313 = vst [vmem:[#allocation2 + $0x60] sm:$0xff] %v297
  %314 = vst [vmem:[#allocation2 + $0x68] sm:$0xff] %v298
  %315 = vst [vmem:[#allocation2 + $0x70] sm:$0xff] %v299
  %316 = vst [vmem:[#allocation2 + $0x78] sm:$0xff] %v300
  // Predicated region
  $region30: #{my_sgconv_forward.1} parent=0 // pred_check
    %p317 = pneg %p24
  $region31: #{my_sgconv_forward.1} parent=0 // pred_check_branch
    %319 = sbr.rel (%p317) target = $region33
  $region32: #{my_sgconv_forward.1} parent=0 // pred_region
    %v320 = vld [vmem:[#allocation2] sm:$0xff]
    %v321 = vld [vmem:[#allocation2 + $0x8] sm:$0xff]
    %v322 = vld [vmem:[#allocation2 + $0x10] sm:$0xff]
    %v323 = vld [vmem:[#allocation2 + $0x18] sm:$0xff]
    %v324 = vld [vmem:[#allocation2 + $0x20] sm:$0xff]
    %v325 = vld [vmem:[#allocation2 + $0x28] sm:$0xff]
    %v326 = vld [vmem:[#allocation2 + $0x30] sm:$0xff]
    %v327 = vld [vmem:[#allocation2 + $0x38] sm:$0xff]
    %v328 = vld [vmem:[#allocation2 + $0x40] sm:$0xff]
    %v329 = vld [vmem:[#allocation2 + $0x48] sm:$0xff]
    %v330 = vld [vmem:[#allocation2 + $0x50] sm:$0xff]
    %v331 = vld [vmem:[#allocation2 + $0x58] sm:$0xff]
    %v332 = vld [vmem:[#allocation2 + $0x60] sm:$0xff]
    %v333 = vld [vmem:[#allocation2 + $0x68] sm:$0xff]
    %v334 = vld [vmem:[#allocation2 + $0x70] sm:$0xff]
    %v335 = vld [vmem:[#allocation2 + $0x78] sm:$0xff]
    %v336 = vld [vmem:[%s2] sm:$0xff]
    %v337 = vld [vmem:[%s2 + $0x8] sm:$0xff]
    %v338 = vld [vmem:[%s2 + $0x10] sm:$0xff]
    %v339 = vld [vmem:[%s2 + $0x18] sm:$0xff]
    %v340 = vld [vmem:[%s2 + $0x20] sm:$0xff]
    %v341 = vld [vmem:[%s2 + $0x28] sm:$0xff]
    %v342 = vld [vmem:[%s2 + $0x30] sm:$0xff]
    %v343 = vld [vmem:[%s2 + $0x38] sm:$0xff]
    %v344 = vld [vmem:[%s2 + $0x40] sm:$0xff]
    %v345 = vld [vmem:[%s2 + $0x48] sm:$0xff]
    %v346 = vld [vmem:[%s2 + $0x50] sm:$0xff]
    %v347 = vld [vmem:[%s2 + $0x58] sm:$0xff]
    %v348 = vld [vmem:[%s2 + $0x60] sm:$0xff]
    %v349 = vld [vmem:[%s2 + $0x68] sm:$0xff]
    %v350 = vld [vmem:[%s2 + $0x70] sm:$0xff]
    %v351 = vld [vmem:[%s2 + $0x78] sm:$0xff]
    %353 = vset.pattern.permute.xlu0 0
    %354 = vperm.xlu0 %353, %v336
    %v355 = vpop.permute.xlu0 %354
    %358 = vset.pattern.permute.xlu0 0
    %359 = vperm.xlu0 %358, %v337
    %v360 = vpop.permute.xlu0 %359
    %363 = vset.pattern.permute.xlu0 0
    %364 = vperm.xlu0 %363, %v338
    %v365 = vpop.permute.xlu0 %364
    %368 = vset.pattern.permute.xlu0 0
    %369 = vperm.xlu0 %368, %v339
    %v370 = vpop.permute.xlu0 %369
    %373 = vset.pattern.permute.xlu0 0
    %374 = vperm.xlu0 %373, %v340
    %v375 = vpop.permute.xlu0 %374
    %378 = vset.pattern.permute.xlu0 0
    %379 = vperm.xlu0 %378, %v341
    %v380 = vpop.permute.xlu0 %379
    %383 = vset.pattern.permute.xlu0 0
    %384 = vperm.xlu0 %383, %v342
    %v385 = vpop.permute.xlu0 %384
    %388 = vset.pattern.permute.xlu0 0
    %389 = vperm.xlu0 %388, %v343
    %v390 = vpop.permute.xlu0 %389
    %393 = vset.pattern.permute.xlu0 0
    %394 = vperm.xlu0 %393, %v344
    %v395 = vpop.permute.xlu0 %394
    %398 = vset.pattern.permute.xlu0 0
    %399 = vperm.xlu0 %398, %v345
    %v400 = vpop.permute.xlu0 %399
    %403 = vset.pattern.permute.xlu0 0
    %404 = vperm.xlu0 %403, %v346
    %v405 = vpop.permute.xlu0 %404
    %408 = vset.pattern.permute.xlu0 0
    %409 = vperm.xlu0 %408, %v347
    %v410 = vpop.permute.xlu0 %409
    %413 = vset.pattern.permute.xlu0 0
    %414 = vperm.xlu0 %413, %v348
    %v415 = vpop.permute.xlu0 %414
    %418 = vset.pattern.permute.xlu0 0
    %419 = vperm.xlu0 %418, %v349
    %v420 = vpop.permute.xlu0 %419
    %423 = vset.pattern.permute.xlu0 0
    %424 = vperm.xlu0 %423, %v350
    %v425 = vpop.permute.xlu0 %424
    %428 = vset.pattern.permute.xlu0 0
    %429 = vperm.xlu0 %428, %v351
    %v430 = vpop.permute.xlu0 %429
    %v432 = vmul.f32 %v320, %v355
    %v433 = vmul.f32 %v321, %v360
    %v434 = vmul.f32 %v322, %v365
    %v435 = vmul.f32 %v323, %v370
    %v436 = vmul.f32 %v324, %v375
    %v437 = vmul.f32 %v325, %v380
    %v438 = vmul.f32 %v326, %v385
    %v439 = vmul.f32 %v327, %v390
    %v440 = vmul.f32 %v328, %v395
    %v441 = vmul.f32 %v329, %v400
    %v442 = vmul.f32 %v330, %v405
    %v443 = vmul.f32 %v331, %v410
    %v444 = vmul.f32 %v332, %v415
    %v445 = vmul.f32 %v333, %v420
    %v446 = vmul.f32 %v334, %v425
    %v447 = vmul.f32 %v335, %v430
    %v448 = vld [vmem:[%s3] sm:$0x1]
    %v450 = vlaneseq
    %v451 = vshrl.u32 %v450, 7
    %v452 = vsub.s32 0, %v451
    %v453 = vrot.slane %v448, %v452
    %v455 = vadd.f32 %v432, %v453
    %v456 = vadd.f32 %v433, %v453
    %v457 = vadd.f32 %v434, %v453
    %v458 = vadd.f32 %v435, %v453
    %v459 = vadd.f32 %v436, %v453
    %v460 = vadd.f32 %v437, %v453
    %v461 = vadd.f32 %v438, %v453
    %v462 = vadd.f32 %v439, %v453
    %v463 = vadd.f32 %v440, %v453
    %v464 = vadd.f32 %v441, %v453
    %v465 = vadd.f32 %v442, %v453
    %v466 = vadd.f32 %v443, %v453
    %v467 = vadd.f32 %v444, %v453
    %v468 = vadd.f32 %v445, %v453
    %v469 = vadd.f32 %v446, %v453
    %v470 = vadd.f32 %v447, %v453
    %v471 = vmax.f32 %v455, 0.0
    %v472 = vmax.f32 %v456, 0.0
    %v473 = vmax.f32 %v457, 0.0
    %v474 = vmax.f32 %v458, 0.0
    %v475 = vmax.f32 %v459, 0.0
    %v476 = vmax.f32 %v460, 0.0
    %v477 = vmax.f32 %v461, 0.0
    %v478 = vmax.f32 %v462, 0.0
    %v479 = vmax.f32 %v463, 0.0
    %v480 = vmax.f32 %v464, 0.0
    %v481 = vmax.f32 %v465, 0.0
    %v482 = vmax.f32 %v466, 0.0
    %v483 = vmax.f32 %v467, 0.0
    %v484 = vmax.f32 %v468, 0.0
    %v485 = vmax.f32 %v469, 0.0
    %v486 = vmax.f32 %v470, 0.0
    %v487 = vld [vmem:[%s4] sm:$0xff]
    %v488 = vld [vmem:[%s4 + $0x8] sm:$0xff]
    %v489 = vld [vmem:[%s4 + $0x10] sm:$0xff]
    %v490 = vld [vmem:[%s4 + $0x18] sm:$0xff]
    %v491 = vld [vmem:[%s4 + $0x20] sm:$0xff]
    %v492 = vld [vmem:[%s4 + $0x28] sm:$0xff]
    %v493 = vld [vmem:[%s4 + $0x30] sm:$0xff]
    %v494 = vld [vmem:[%s4 + $0x38] sm:$0xff]
    %v495 = vld [vmem:[%s4 + $0x40] sm:$0xff]
    %v496 = vld [vmem:[%s4 + $0x48] sm:$0xff]
    %v497 = vld [vmem:[%s4 + $0x50] sm:$0xff]
    %v498 = vld [vmem:[%s4 + $0x58] sm:$0xff]
    %v499 = vld [vmem:[%s4 + $0x60] sm:$0xff]
    %v500 = vld [vmem:[%s4 + $0x68] sm:$0xff]
    %v501 = vld [vmem:[%s4 + $0x70] sm:$0xff]
    %v502 = vld [vmem:[%s4 + $0x78] sm:$0xff]
    %v503 = vld [vmem:[%s5] sm:$0x1]
    %v505 = vlaneseq
    %v506 = vshrl.u32 %v505, 7
    %v507 = vsub.s32 0, %v506
    %v508 = vrot.slane %v503, %v507
    %510 = vmatprep.subr.mxu0 0.0
    %511 = vmatpush1.msra.mxu0 %v487
    %512 = vmatprep.subr.mxu0 0.0
    %513 = vmatpush1.msra.mxu0 %v488
    %514 = vmatprep.subr.mxu0 0.0
    %515 = vmatpush1.msra.mxu0 %v489
    %516 = vmatprep.subr.mxu0 0.0
    %517 = vmatpush1.msra.mxu0 %v490
    %518 = vmatprep.subr.mxu0 0.0
    %519 = vmatpush1.msra.mxu0 %v491
    %520 = vmatprep.subr.mxu0 0.0
    %521 = vmatpush1.msra.mxu0 %v492
    %522 = vmatprep.subr.mxu0 0.0
    %523 = vmatpush1.msra.mxu0 %v493
    %524 = vmatprep.subr.mxu0 0.0
    %525 = vmatpush1.msra.mxu0 %v494
    %526 = vmatprep.subr.mxu0 0.0
    %527 = vmatpush1.msra.mxu0 %v495
    %528 = vmatprep.subr.mxu0 0.0
    %529 = vmatpush1.msra.mxu0 %v496
    %530 = vmatprep.subr.mxu0 0.0
    %531 = vmatpush1.msra.mxu0 %v497
    %532 = vmatprep.subr.mxu0 0.0
    %533 = vmatpush1.msra.mxu0 %v498
    %534 = vmatprep.subr.mxu0 0.0
    %535 = vmatpush1.msra.mxu0 %v499
    %536 = vmatprep.subr.mxu0 0.0
    %537 = vmatpush1.msra.mxu0 %v500
    %538 = vmatprep.subr.mxu0 0.0
    %539 = vmatpush1.msra.mxu0 %v501
    %540 = vmatprep.subr.mxu0 0.0
    %541 = vmatpush1.msra.mxu0 %v502
    %542 = vmatprep.subr.mxu0 0.0
    %543 = vmatpush1.msra.mxu0 0.0
    %544 = vmatprep.subr.mxu0 0.0
    %545 = vmatpush1.msra.mxu0 0.0
    %546 = vmatprep.subr.mxu0 0.0
    %547 = vmatpush1.msra.mxu0 0.0
    %548 = vmatprep.subr.mxu0 0.0
    %549 = vmatpush1.msra.mxu0 0.0
    %550 = vmatprep.subr.mxu0 0.0
    %551 = vmatpush1.msra.mxu0 0.0
    %552 = vmatprep.subr.mxu0 0.0
    %553 = vmatpush1.msra.mxu0 0.0
    %554 = vmatprep.subr.mxu0 0.0
    %555 = vmatpush1.msra.mxu0 0.0
    %556 = vmatprep.subr.mxu0 0.0
    %557 = vmatpush1.msra.mxu0 0.0
    %558 = vmatprep.subr.mxu0 0.0
    %559 = vmatpush1.msra.mxu0 0.0
    %560 = vmatprep.subr.mxu0 0.0
    %561 = vmatpush1.msra.mxu0 0.0
    %562 = vmatprep.subr.mxu0 0.0
    %563 = vmatpush1.msra.mxu0 0.0
    %564 = vmatprep.subr.mxu0 0.0
    %565 = vmatpush1.msra.mxu0 0.0
    %566 = vmatprep.subr.mxu0 0.0
    %567 = vmatpush1.msra.mxu0 0.0
    %568 = vmatprep.subr.mxu0 0.0
    %569 = vmatpush1.msra.mxu0 0.0
    %570 = vmatprep.subr.mxu0 0.0
    %571 = vmatpush1.msra.mxu0 0.0
    %572 = vmatprep.subr.mxu0 0.0
    %573 = vmatpush1.msra.mxu0 0.0
    %574 = vmatprep.mubr.f32.mxu0 0.0
    %575 = vmatmul.mubr.f32.gmra.mrb[0].mxu0 %v471
    %v576 = vpop.f32.mrb[0].mxu0
    %v577 = vadd.f32 %v508, %v576
    %v578 = vpop.f32.mrb[0].mxu0
    %579 = vmatprep.mubr.f32.mxu0 0.0
    %580 = vmatmul.mubr.f32.gmra.mrb[0].mxu0 %v472
    %v581 = vpop.f32.mrb[0].mxu0
    %v582 = vadd.f32 %v508, %v581
    %v583 = vpop.f32.mrb[0].mxu0
    %584 = vmatprep.mubr.f32.mxu0 0.0
    %585 = vmatmul.mubr.f32.gmra.mrb[0].mxu0 %v473
    %v586 = vpop.f32.mrb[0].mxu0
    %v587 = vadd.f32 %v508, %v586
    %v588 = vpop.f32.mrb[0].mxu0
    %589 = vmatprep.mubr.f32.mxu0 0.0
    %590 = vmatmul.mubr.f32.gmra.mrb[0].mxu0 %v474
    %v591 = vpop.f32.mrb[0].mxu0
    %v592 = vadd.f32 %v508, %v591
    %v593 = vpop.f32.mrb[0].mxu0
    %594 = vmatprep.mubr.f32.mxu0 0.0
    %595 = vmatmul.mubr.f32.gmra.mrb[0].mxu0 %v475
    %v596 = vpop.f32.mrb[0].mxu0
    %v597 = vadd.f32 %v508, %v596
    %v598 = vpop.f32.mrb[0].mxu0
    %599 = vmatprep.mubr.f32.mxu0 0.0
    %600 = vmatmul.mubr.f32.gmra.mrb[0].mxu0 %v476
    %v601 = vpop.f32.mrb[0].mxu0
    %v602 = vadd.f32 %v508, %v601
    %v603 = vpop.f32.mrb[0].mxu0
    %604 = vmatprep.mubr.f32.mxu0 0.0
    %605 = vmatmul.mubr.f32.gmra.mrb[0].mxu0 %v477
    %v606 = vpop.f32.mrb[0].mxu0
    %v607 = vadd.f32 %v508, %v606
    %v608 = vpop.f32.mrb[0].mxu0
    %609 = vmatprep.mubr.f32.mxu0 0.0
    %610 = vmatmul.mubr.f32.gmra.mrb[0].mxu0 %v478
    %v611 = vpop.f32.mrb[0].mxu0
    %v612 = vadd.f32 %v508, %v611
    %v613 = vpop.f32.mrb[0].mxu0
    %614 = vmatprep.mubr.f32.mxu0 0.0
    %615 = vmatmul.mubr.f32.gmra.mrb[0].mxu0 %v479
    %v616 = vpop.f32.mrb[0].mxu0
    %v617 = vadd.f32 %v508, %v616
    %v618 = vpop.f32.mrb[0].mxu0
    %619 = vmatprep.mubr.f32.mxu0 0.0
    %620 = vmatmul.mubr.f32.gmra.mrb[0].mxu0 %v480
    %v621 = vpop.f32.mrb[0].mxu0
    %v622 = vadd.f32 %v508, %v621
    %v623 = vpop.f32.mrb[0].mxu0
    %624 = vmatprep.mubr.f32.mxu0 0.0
    %625 = vmatmul.mubr.f32.gmra.mrb[0].mxu0 %v481
    %v626 = vpop.f32.mrb[0].mxu0
    %v627 = vadd.f32 %v508, %v626
    %v628 = vpop.f32.mrb[0].mxu0
    %629 = vmatprep.mubr.f32.mxu0 0.0
    %630 = vmatmul.mubr.f32.gmra.mrb[0].mxu0 %v482
    %v631 = vpop.f32.mrb[0].mxu0
    %v632 = vadd.f32 %v508, %v631
    %v633 = vpop.f32.mrb[0].mxu0
    %634 = vmatprep.mubr.f32.mxu0 0.0
    %635 = vmatmul.mubr.f32.gmra.mrb[0].mxu0 %v483
    %v636 = vpop.f32.mrb[0].mxu0
    %v637 = vadd.f32 %v508, %v636
    %v638 = vpop.f32.mrb[0].mxu0
    %639 = vmatprep.mubr.f32.mxu0 0.0
    %640 = vmatmul.mubr.f32.gmra.mrb[0].mxu0 %v484
    %v641 = vpop.f32.mrb[0].mxu0
    %v642 = vadd.f32 %v508, %v641
    %v643 = vpop.f32.mrb[0].mxu0
    %644 = vmatprep.mubr.f32.mxu0 0.0
    %645 = vmatmul.mubr.f32.gmra.mrb[0].mxu0 %v485
    %v646 = vpop.f32.mrb[0].mxu0
    %v647 = vadd.f32 %v508, %v646
    %v648 = vpop.f32.mrb[0].mxu0
    %649 = vmatprep.mubr.f32.mxu0 0.0
    %650 = vmatmul.mubr.f32.gmra.mrb[0].mxu0 %v486
    %v651 = vpop.f32.mrb[0].mxu0
    %v652 = vadd.f32 %v508, %v651
    %v653 = vpop.f32.mrb[0].mxu0
    %654 = vdwg.mxu0
    %v655 = vmax.f32 %v577, 0.0
    %v656 = vmax.f32 %v582, 0.0
    %v657 = vmax.f32 %v587, 0.0
    %v658 = vmax.f32 %v592, 0.0
    %v659 = vmax.f32 %v597, 0.0
    %v660 = vmax.f32 %v602, 0.0
    %v661 = vmax.f32 %v607, 0.0
    %v662 = vmax.f32 %v612, 0.0
    %v663 = vmax.f32 %v617, 0.0
    %v664 = vmax.f32 %v622, 0.0
    %v665 = vmax.f32 %v627, 0.0
    %v666 = vmax.f32 %v632, 0.0
    %v667 = vmax.f32 %v637, 0.0
    %v668 = vmax.f32 %v642, 0.0
    %v669 = vmax.f32 %v647, 0.0
    %v670 = vmax.f32 %v652, 0.0
    %671 = vst [vmem:[%s6] sm:$0xff] %v655
    %672 = vst [vmem:[%s6 + $0x8] sm:$0xff] %v656
    %673 = vst [vmem:[%s6 + $0x10] sm:$0xff] %v657
    %674 = vst [vmem:[%s6 + $0x18] sm:$0xff] %v658
    %675 = vst [vmem:[%s6 + $0x20] sm:$0xff] %v659
    %676 = vst [vmem:[%s6 + $0x28] sm:$0xff] %v660
    %677 = vst [vmem:[%s6 + $0x30] sm:$0xff] %v661
    %678 = vst [vmem:[%s6 + $0x38] sm:$0xff] %v662
    %679 = vst [vmem:[%s6 + $0x40] sm:$0xff] %v663
    %680 = vst [vmem:[%s6 + $0x48] sm:$0xff] %v664
    %681 = vst [vmem:[%s6 + $0x50] sm:$0xff] %v665
    %682 = vst [vmem:[%s6 + $0x58] sm:$0xff] %v666
    %683 = vst [vmem:[%s6 + $0x60] sm:$0xff] %v667
    %684 = vst [vmem:[%s6 + $0x68] sm:$0xff] %v668
    %685 = vst [vmem:[%s6 + $0x70] sm:$0xff] %v669
    %686 = vst [vmem:[%s6 + $0x78] sm:$0xff] %v670
  $region33: #{my_sgconv_forward.1} parent=0 // pred_fallthru
    _
  // Predicated region
  $region34: #{my_sgconv_forward.1} parent=0 // pred_check
    _
  $region35: #{my_sgconv_forward.1} parent=0 // pred_check_branch
    %688 = sbr.rel (0) target = $region37
  $region36: #{my_sgconv_forward.1} parent=0 // pred_region
    _
  $region37: #{my_sgconv_forward.1} parent=0 // pred_fallthru
    _
  // Predicated region
  $region38: #{my_sgconv_forward.1} parent=0 // pred_check
    _
  $region39: #{my_sgconv_forward.1} parent=0 // pred_check_branch
    %690 = sbr.rel (0) target = $region41
  $region40: #{my_sgconv_forward.1} parent=0 // pred_region
    _
  $region41: #{my_sgconv_forward.1} parent=0 // pred_fallthru
    _

</llo_original>
